<compile_context>
chip_gen: v5e
topology: v5e:2x2
jax: 0.10.0
libtpu: 0.0.40
codegen_flags: <defaults>
</compile_context>

<pallas_src>
import jax
import jax.numpy as jnp
from jax.experimental import pallas as pl
from jax.experimental.pallas import tpu as pltpu


def _mlp_head_kernel(x_ref, t_ref, w1_ref, b1_ref, w2_ref, b2_ref,
                     pred_ref, sqerr_ref):
    # Layer 1 on the MXU: (TB, D_in) @ (D_in, H) + b1, f32 accumulation.
    h = jnp.dot(x_ref[...], w1_ref[...],
                preferred_element_type=jnp.float32) + b1_ref[...]
    h = jnp.maximum(h, 0.0)       # ReLU; Dropout(p=0.0 / eval) is a no-op.

    # Layer 2 (out_features == 1) on VPU + XLU: multiply by the lane-dense
    # (1, H) w2 row and reduce over H.  Keeps the MXU free for layer 1.
    pred = jnp.sum(h * w2_ref[...], axis=-1) + b2_ref[0]        # (TB,)
    pred2d = pred[None, None, :]                                # (1, 1, TB)
    pred_ref[...] = pred2d.astype(pred_ref.dtype)

    # Per-row squared error, stored lane-dense; the MSE mean over the real
    # (un-padded) batch is finished in the wrapper.
    diff = pred2d - t_ref[...]
    sqerr_ref[...] = diff * diff


def value_prediction_head(pooled_output, targets, w1, b1, w2, b2,
                          *, block_b=128, compute_dtype=None):
    """MLP head (weight-normed Linear -> ReLU -> Linear) + MSE loss.

    pooled_output: (B, D_in) f32
    targets:       (B, 1)    f32
    w1: (D_in, H), b1: (1, H), w2: (H, 1), b2: (1, 1)  -- effective (post
    weight_norm) parameters, stored transposed vs. PyTorch so the kernel
    computes x @ W + b directly.
    compute_dtype: optionally jnp.bfloat16 to feed the bf16-native MXU on
    v6e/v7x (f32 accumulation is kept).

    Returns (loss, None, None, value_pred) mirroring the PyTorch module.
    """
    B, d_in = pooled_output.shape
    hid = w1.shape[1]

    if compute_dtype is not None:
        pooled_output = pooled_output.astype(compute_dtype)
        w1 = w1.astype(compute_dtype)

    grid_b = pl.cdiv(B, block_b)
    b_pad = grid_b * block_b

    # Pad the batch to a whole number of tiles; padded rows are sliced away
    # before the loss reduction, so they never affect the result.
    x = jnp.pad(pooled_output, ((0, b_pad - B), (0, 0)))
    # Lane-dense (grid_b, 1, block_b) layouts for targets / pred / sq-err.
    t = jnp.pad(targets.reshape(B).astype(jnp.float32), (0, b_pad - B))
    t = t.reshape(grid_b, 1, block_b)
    w2_row = w2.reshape(1, hid).astype(jnp.float32)   # (H, 1) -> (1, H)
    b2_s = b2.reshape(1).astype(jnp.float32)          # scalar bias via SMEM

    pred_rows, sqerr_rows = pl.pallas_call(
        _mlp_head_kernel,
        grid=(grid_b,),
        in_specs=[
            pl.BlockSpec((block_b, d_in), lambda i: (i, 0)),     # x tile
            pl.BlockSpec((1, 1, block_b), lambda i: (i, 0, 0)),  # targets tile
            pl.BlockSpec((d_in, hid), lambda i: (0, 0)),         # w1 (resident)
            pl.BlockSpec((1, hid), lambda i: (0, 0)),            # b1 (resident)
            pl.BlockSpec((1, hid), lambda i: (0, 0)),            # w2 row (resident)
            pl.BlockSpec(memory_space=pltpu.SMEM),               # b2 scalar
        ],
        out_specs=(
            pl.BlockSpec((1, 1, block_b), lambda i: (i, 0, 0)),  # pred (lane-dense)
            pl.BlockSpec((1, 1, block_b), lambda i: (i, 0, 0)),  # sq-err (lane-dense)
        ),
        out_shape=(
            jax.ShapeDtypeStruct((grid_b, 1, block_b), jnp.float32),
            jax.ShapeDtypeStruct((grid_b, 1, block_b), jnp.float32),
        ),
        compiler_params=pltpu.CompilerParams(
            dimension_semantics=("parallel",)),   # shards over v7x's 2 TCs
    )(x, t, w1, b1, w2_row, b2_s)

    value_pred = pred_rows.reshape(b_pad, 1)[:B]
    # nn.MSELoss() default reduction='mean' over all B*1 elements.
    loss = jnp.sum(sqerr_rows.reshape(b_pad)[:B]) / (B * 1)
    return loss, None, None, value_pred


def _weight_norm_effective(v, g):
    # PyTorch weight_norm(dim=None): W = g * v / ||v||_F  with scalar g.
    return g * v / jnp.sqrt(jnp.sum(v * v))


if __name__ == "__main__":
    # Small shapes consistent with the module: hidden_size (encoder_embed_dim)
    # shrunk to 32; hidden_dimention kept at 512 as in the module; out_dim = 1.
    B, D_IN, HID, D_OUT = 8, 32, 512, 1

    key = jax.random.PRNGKey(0)
    k_x, k_t, k_v1, k_b1, k_v2, k_b2, k_x2, k_t2 = jax.random.split(key, 8)

    pooled_output = jax.random.normal(k_x, (B, D_IN), dtype=jnp.float32)
    targets = jax.random.normal(k_t, (B, D_OUT), dtype=jnp.float32)

    # Deterministic parameter init (Kaiming-uniform-like bounds as nn.Linear).
    bound1 = 1.0 / jnp.sqrt(D_IN)
    v1 = jax.random.uniform(k_v1, (D_IN, HID), jnp.float32, -bound1, bound1)
    b1 = jax.random.uniform(k_b1, (1, HID), jnp.float32, -bound1, bound1)
    bound2 = 1.0 / jnp.sqrt(HID)
    v2 = jax.random.uniform(k_v2, (HID, D_OUT), jnp.float32, -bound2, bound2)
    b2 = jax.random.uniform(k_b2, (1, D_OUT), jnp.float32, -bound2, bound2)

    # weight_norm init sets g = ||v||_F; keep the reparameterized form anyway.
    g1 = jnp.sqrt(jnp.sum(v1 * v1))
    g2 = jnp.sqrt(jnp.sum(v2 * v2))
    w1 = _weight_norm_effective(v1, g1)
    w2 = _weight_norm_effective(v2, g2)

    head = jax.jit(value_prediction_head,
                   static_argnames=("block_b", "compute_dtype"))

    # --- f32 path (single batch tile) -------------------------------------
    loss, _, _, value_pred = head(pooled_output, targets, w1, b1, w2, b2)
    jax.block_until_ready((loss, value_pred))

    h_ref = jnp.maximum(pooled_output @ w1 + b1, 0.0)
    pred_ref = h_ref @ w2 + b2
    loss_ref = jnp.mean((pred_ref - targets) ** 2)
    assert value_pred.shape == (B, D_OUT)
    assert jnp.allclose(value_pred, pred_ref, atol=1e-5, rtol=1e-5)
    assert jnp.allclose(loss, loss_ref, atol=1e-5, rtol=1e-5)

    # --- multi-tile grid path (B not a multiple of block_b) ----------------
    B2 = 300
    x2 = jax.random.normal(k_x2, (B2, D_IN), dtype=jnp.float32)
    t2 = jax.random.normal(k_t2, (B2, D_OUT), dtype=jnp.float32)
    loss2, _, _, pred2 = head(x2, t2, w1, b1, w2, b2)
    jax.block_until_ready((loss2, pred2))
    pred2_ref = jnp.maximum(x2 @ w1 + b1, 0.0) @ w2 + b2
    loss2_ref = jnp.mean((pred2_ref - t2) ** 2)
    assert pred2.shape == (B2, D_OUT)
    assert jnp.allclose(pred2, pred2_ref, atol=1e-5, rtol=1e-5)
    assert jnp.allclose(loss2, loss2_ref, atol=1e-5, rtol=1e-5)

    # --- bf16-operand path (v6e/v7x MXU-native), looser tolerance ----------
    loss_bf, _, _, pred_bf = head(pooled_output, targets, w1, b1, w2, b2,
                                  compute_dtype=jnp.bfloat16)
    jax.block_until_ready((loss_bf, pred_bf))
    assert jnp.allclose(pred_bf, pred_ref, atol=5e-2, rtol=5e-2)
    assert jnp.allclose(loss_bf, loss_ref, atol=1e-1, rtol=1e-1)

    print("KERNEL_OK")
</pallas_src>

<mosaic_0001>
module attributes {stable_mosaic.version = 11 : i64} {
  func.func @_mlp_head_kernel(%arg0: i32, %arg1: memref<128x32xf32, #tpu.memory_space<vmem>>, %arg2: memref<1x1x128xf32, #tpu.memory_space<vmem>>, %arg3: memref<32x512xf32, #tpu.memory_space<vmem>>, %arg4: memref<1x512xf32, #tpu.memory_space<vmem>>, %arg5: memref<1x512xf32, #tpu.memory_space<vmem>>, %arg6: memref<1xf32, #tpu.memory_space<smem>>, %arg7: memref<1x1x128xf32, #tpu.memory_space<vmem>>, %arg8: memref<1x1x128xf32, #tpu.memory_space<vmem>>) attributes {dimension_semantics = [#tpu.dimension_semantics<parallel>], iteration_bounds = array<i64: 1>, scalar_prefetch = 0 : i64, scratch_operands = 0 : i64, tpu.core_type = #tpu.core_type<tc>, window_params = [{transform_indices = @transform_0, window_bounds = array<i64: 128, 32>}, {transform_indices = @transform_1, window_bounds = array<i64: 1, 1, 128>}, {pipeline_mode = #tpu.pipeline_mode<synchronous>, transform_indices = @transform_2, window_bounds = array<i64: 32, 512>}, {pipeline_mode = #tpu.pipeline_mode<synchronous>, transform_indices = @transform_3, window_bounds = array<i64: 1, 512>}, {pipeline_mode = #tpu.pipeline_mode<synchronous>, transform_indices = @transform_4, window_bounds = array<i64: 1, 512>}, {transform_indices = @transform_5, window_bounds = array<i64: 1>}, {transform_indices = @transform_6, window_bounds = array<i64: 1, 1, 128>}, {transform_indices = @transform_7, window_bounds = array<i64: 1, 1, 128>}]} {
    %c0 = arith.constant 0 : index
    %c0_0 = arith.constant 0 : index
    %0 = vector.load %arg1[%c0, %c0_0] : memref<128x32xf32, #tpu.memory_space<vmem>>, vector<128x32xf32>
    %c0_1 = arith.constant 0 : index
    %c0_2 = arith.constant 0 : index
    %1 = vector.load %arg3[%c0_1, %c0_2] : memref<32x512xf32, #tpu.memory_space<vmem>>, vector<32x512xf32>
    %cst = arith.constant dense<0.000000e+00> : vector<128x512xf32>
    %2 = tpu.matmul %0, %1, %cst {dimension_numbers = #tpu.dot_dimension_numbers<[1], [0], [0], [1], [0, 0, 1, 1], [], []>} : vector<128x32xf32>, vector<32x512xf32>, vector<128x512xf32> -> vector<128x512xf32>
    %c0_3 = arith.constant 0 : index
    %c0_4 = arith.constant 0 : index
    %3 = vector.load %arg4[%c0_3, %c0_4] : memref<1x512xf32, #tpu.memory_space<vmem>>, vector<1x512xf32>
    %4 = vector.broadcast %3 : vector<1x512xf32> to vector<128x512xf32>
    %5 = arith.addf %2, %4 : vector<128x512xf32>
    %cst_5 = arith.constant 0.000000e+00 : f32
    %6 = vector.broadcast %cst_5 : f32 to vector<128x512xf32>
    %7 = arith.maximumf %5, %6 : vector<128x512xf32>
    %c0_6 = arith.constant 0 : index
    %c0_7 = arith.constant 0 : index
    %8 = vector.load %arg5[%c0_6, %c0_7] : memref<1x512xf32, #tpu.memory_space<vmem>>, vector<1x512xf32>
    %9 = vector.broadcast %8 : vector<1x512xf32> to vector<128x512xf32>
    %10 = arith.mulf %7, %9 : vector<128x512xf32>
    %cst_8 = arith.constant dense<0.000000e+00> : vector<128xf32>
    %11 = vector.multi_reduction <add>, %10, %cst_8 [1] : vector<128x512xf32> to vector<128xf32>
    %c0_9 = arith.constant 0 : index
    %12 = memref.load %arg6[%c0_9] : memref<1xf32, #tpu.memory_space<smem>>
    %13 = vector.broadcast %12 : f32 to vector<128xf32>
    %14 = arith.addf %11, %13 : vector<128xf32>
    %15 = vector.shape_cast %14 : vector<128xf32> to vector<1x1x128xf32>
    %c0_10 = arith.constant 0 : index
    %c0_11 = arith.constant 0 : index
    %c0_12 = arith.constant 0 : index
    %16 = vector.load %arg7[%c0_10, %c0_11, %c0_12] : memref<1x1x128xf32, #tpu.memory_space<vmem>>, vector<1x1x128xf32>
    tpu.vector_store %arg7[%c0_10, %c0_11, %c0_12], %15 {strides = array<i32>} : memref<1x1x128xf32, #tpu.memory_space<vmem>>, vector<1x1x128xf32>,
    %c0_13 = arith.constant 0 : index
    %c0_14 = arith.constant 0 : index
    %c0_15 = arith.constant 0 : index
    %17 = vector.load %arg2[%c0_13, %c0_14, %c0_15] : memref<1x1x128xf32, #tpu.memory_space<vmem>>, vector<1x1x128xf32>
    %18 = arith.subf %15, %17 : vector<1x1x128xf32>
    %19 = arith.mulf %18, %18 : vector<1x1x128xf32>
    %c0_16 = arith.constant 0 : index
    %c0_17 = arith.constant 0 : index
    %c0_18 = arith.constant 0 : index
    %20 = vector.load %arg8[%c0_16, %c0_17, %c0_18] : memref<1x1x128xf32, #tpu.memory_space<vmem>>, vector<1x1x128xf32>
    tpu.vector_store %arg8[%c0_16, %c0_17, %c0_18], %19 {strides = array<i32>} : memref<1x1x128xf32, #tpu.memory_space<vmem>>, vector<1x1x128xf32>,
    return
  }
  func.func @transform_0(%arg0: i32) -> (i32, i32) {
    %c0_i32 = arith.constant 0 : i32
    %c0_i32_0 = arith.constant 0 : i32
    return %arg0, %c0_i32 : i32, i32
  }
  func.func @transform_1(%arg0: i32) -> (i32, i32, i32) {
    %c0_i32 = arith.constant 0 : i32
    %c0_i32_0 = arith.constant 0 : i32
    %c0_i32_1 = arith.constant 0 : i32
    return %arg0, %c0_i32, %c0_i32_0 : i32, i32, i32
  }
  func.func @transform_2(%arg0: i32) -> (i32, i32) {
    %c0_i32 = arith.constant 0 : i32
    %c0_i32_0 = arith.constant 0 : i32
    %c0_i32_1 = arith.constant 0 : i32
    return %c0_i32, %c0_i32_0 : i32, i32
  }
  func.func @transform_3(%arg0: i32) -> (i32, i32) {
    %c0_i32 = arith.constant 0 : i32
    %c0_i32_0 = arith.constant 0 : i32
    %c0_i32_1 = arith.constant 0 : i32
    return %c0_i32, %c0_i32_0 : i32, i32
  }
  func.func @transform_4(%arg0: i32) -> (i32, i32) {
    %c0_i32 = arith.constant 0 : i32
    %c0_i32_0 = arith.constant 0 : i32
    %c0_i32_1 = arith.constant 0 : i32
    return %c0_i32, %c0_i32_0 : i32, i32
  }
  func.func @transform_5(%arg0: i32) -> i32 {
    %c0_i32 = arith.constant 0 : i32
    %c0_i32_0 = arith.constant 0 : i32
    return %c0_i32 : i32
  }
  func.func @transform_6(%arg0: i32) -> (i32, i32, i32) {
    %c0_i32 = arith.constant 0 : i32
    %c0_i32_0 = arith.constant 0 : i32
    %c0_i32_1 = arith.constant 0 : i32
    return %arg0, %c0_i32, %c0_i32_0 : i32, i32, i32
  }
  func.func @transform_7(%arg0: i32) -> (i32, i32, i32) {
    %c0_i32 = arith.constant 0 : i32
    %c0_i32_0 = arith.constant 0 : i32
    %c0_i32_1 = arith.constant 0 : i32
    return %arg0, %c0_i32, %c0_i32_0 : i32, i32, i32
  }
}

</mosaic_0001>

<llo_original>
// kernel: value_prediction_head.1
$region0: #{value_prediction_head.1}
  #allocation0 [shape = 'u32[]', space=smem, size = 0x4, offset = 0x4, fixed_abs, tag = 'smem constant byte address 0x4 - core index']
  #allocation1 [shape = 'u32[72,128]{1,0:T(1,128)}', space=vmem, size = 0x9000, scoped, tag = 'internal scratch']
  #allocation2 [shape = 'f32[1]{0:T(128)S(6)}', space=smem, size = 0x200, scoped, tag = 'scoped memory for value_prediction_head.1']
  %s0 = inlined_call_operand.vmem [shape: f32[128,32], index: 0, kind: input, shape index: {}]
  %s1 = inlined_call_operand.vmem [shape: f32[1,1,128], index: 1, kind: input, shape index: {}]
  %s2 = inlined_call_operand.vmem [shape: f32[32,512], index: 2, kind: input, shape index: {}]
  %s3 = inlined_call_operand.vmem [shape: f32[1,512], index: 3, kind: input, shape index: {}]
  %s4 = inlined_call_operand.vmem [shape: f32[1,512], index: 4, kind: input, shape index: {}]
  %s5 = inlined_call_operand.<no memory space> [shape: f32[1], index: 5, kind: input, shape index: {}]
  %s6 = inlined_call_operand.vmem [shape: f32[1,1,128], index: 6, kind: output, shape index: {0}]
  %s7 = inlined_call_operand.vmem [shape: f32[1,1,128], index: 7, kind: output, shape index: {1}]
  %8 = xla_tuple %s6, %s7
  %s9 = sld [smem:[#allocation0]]
  $region42: #{value_prediction_head.1} parent=0
    _
  %s11 = ssub.s32 1, %s9
  %s12 = scalar_select 0, %s11, %s9
  %13 = sst [smem:[#allocation2]] %s5
  // Predicated region
  $region2: #{value_prediction_head.1} parent=0 // pred_check
    _
  $region3: #{value_prediction_head.1} parent=0 // pred_check_branch
    %15 = sbr.rel (0) target = $region5
  $region4: #{value_prediction_head.1} parent=0 // pred_region
    _
  $region5: #{value_prediction_head.1} parent=0 // pred_fallthru
    _
  // Predicated region
  $region6: #{value_prediction_head.1} parent=0 // pred_check
    _
  $region7: #{value_prediction_head.1} parent=0 // pred_check_branch
    %17 = sbr.rel (0) target = $region9
  $region8: #{value_prediction_head.1} parent=0 // pred_region
    _
  $region9: #{value_prediction_head.1} parent=0 // pred_fallthru
    _
  // Predicated region
  $region10: #{value_prediction_head.1} parent=0 // pred_check
    _
  $region11: #{value_prediction_head.1} parent=0 // pred_check_branch
    %19 = sbr.rel (0) target = $region13
  $region12: #{value_prediction_head.1} parent=0 // pred_region
    _
  $region13: #{value_prediction_head.1} parent=0 // pred_fallthru
    _
  // Predicated region
  $region14: #{value_prediction_head.1} parent=0 // pred_check
    _
  $region15: #{value_prediction_head.1} parent=0 // pred_check_branch
    %21 = sbr.rel (0) target = $region17
  $region16: #{value_prediction_head.1} parent=0 // pred_region
    _
  $region17: #{value_prediction_head.1} parent=0 // pred_fallthru
    _
  // Predicated region
  $region18: #{value_prediction_head.1} parent=0 // pred_check
    _
  $region19: #{value_prediction_head.1} parent=0 // pred_check_branch
    %23 = sbr.rel (0) target = $region21
  $region20: #{value_prediction_head.1} parent=0 // pred_region
    _
  $region21: #{value_prediction_head.1} parent=0 // pred_fallthru
    _
  // Predicated region
  $region22: #{value_prediction_head.1} parent=0 // pred_check
    _
  $region23: #{value_prediction_head.1} parent=0 // pred_check_branch
    %25 = sbr.rel (0) target = $region25
  $region24: #{value_prediction_head.1} parent=0 // pred_region
    _
  $region25: #{value_prediction_head.1} parent=0 // pred_fallthru
    _
  %v26 = vld [vmem:[%s0] sm:$0xff]
  %v27 = vld [vmem:[%s0 + $0x8] sm:$0xff]
  %v28 = vld [vmem:[%s0 + $0x10] sm:$0xff]
  %v29 = vld [vmem:[%s0 + $0x18] sm:$0xff]
  %v30 = vld [vmem:[%s0 + $0x20] sm:$0xff]
  %v31 = vld [vmem:[%s0 + $0x28] sm:$0xff]
  %v32 = vld [vmem:[%s0 + $0x30] sm:$0xff]
  %v33 = vld [vmem:[%s0 + $0x38] sm:$0xff]
  %v34 = vld [vmem:[%s0 + $0x40] sm:$0xff]
  %v35 = vld [vmem:[%s0 + $0x48] sm:$0xff]
  %v36 = vld [vmem:[%s0 + $0x50] sm:$0xff]
  %v37 = vld [vmem:[%s0 + $0x58] sm:$0xff]
  %v38 = vld [vmem:[%s0 + $0x60] sm:$0xff]
  %v39 = vld [vmem:[%s0 + $0x68] sm:$0xff]
  %v40 = vld [vmem:[%s0 + $0x70] sm:$0xff]
  %v41 = vld [vmem:[%s0 + $0x78] sm:$0xff]
  %v42 = vld [vmem:[%s2] sm:$0xff]
  %v43 = vld [vmem:[%s2 + $0x8] sm:$0xff]
  %v44 = vld [vmem:[%s2 + $0x10] sm:$0xff]
  %v45 = vld [vmem:[%s2 + $0x18] sm:$0xff]
  %v46 = vld [vmem:[%s2 + $0x20] sm:$0xff]
  %v47 = vld [vmem:[%s2 + $0x28] sm:$0xff]
  %v48 = vld [vmem:[%s2 + $0x30] sm:$0xff]
  %v49 = vld [vmem:[%s2 + $0x38] sm:$0xff]
  %v50 = vld [vmem:[%s2 + $0x40] sm:$0xff]
  %v51 = vld [vmem:[%s2 + $0x48] sm:$0xff]
  %v52 = vld [vmem:[%s2 + $0x50] sm:$0xff]
  %v53 = vld [vmem:[%s2 + $0x58] sm:$0xff]
  %v54 = vld [vmem:[%s2 + $0x60] sm:$0xff]
  %v55 = vld [vmem:[%s2 + $0x68] sm:$0xff]
  %v56 = vld [vmem:[%s2 + $0x70] sm:$0xff]
  %v57 = vld [vmem:[%s2 + $0x78] sm:$0xff]
  %v58 = vld [vmem:[%s3] sm:$0xf]
  %v60 = vperm.slane %v58, 0
  %v61 = vperm.slane %v58, 1
  %v62 = vperm.slane %v58, 2
  %v63 = vperm.slane %v58, 3
  %vm68 = vcmask 261120
  %v70 = vsel %vm68, %v26, 0
  %v73 = vsel %vm68, %v27, 0
  %v76 = vsel %vm68, %v28, 0
  %v79 = vsel %vm68, %v29, 0
  %v82 = vsel %vm68, %v30, 0
  %v85 = vsel %vm68, %v31, 0
  %v88 = vsel %vm68, %v32, 0
  %v91 = vsel %vm68, %v33, 0
  %v94 = vsel %vm68, %v34, 0
  %v97 = vsel %vm68, %v35, 0
  %v100 = vsel %vm68, %v36, 0
  %v103 = vsel %vm68, %v37, 0
  %v106 = vsel %vm68, %v38, 0
  %v109 = vsel %vm68, %v39, 0
  %v112 = vsel %vm68, %v40, 0
  %v115 = vsel %vm68, %v41, 0
  %117 = vmatpush.msra.mxu0 0.0
  %118 = vmatpush.msra.mxu0 0.0
  %119 = vmatpush.msra.mxu0 0.0
  %120 = vmatpush.msra.mxu0 0.0
  %121 = vmatpush.msra.mxu0 0.0
  %122 = vmatpush.msra.mxu0 0.0
  %123 = vmatpush.msra.mxu0 0.0
  %124 = vmatpush.msra.mxu0 0.0
  %125 = vmatpush.msra.mxu0 0.0
  %126 = vmatpush.msra.mxu0 0.0
  %127 = vmatpush.msra.mxu0 0.0
  %128 = vmatpush.msra.mxu0 0.0
  %129 = vmatpush.msra.mxu0 %v54
  %130 = vmatpush.msra.mxu0 %v50
  %131 = vmatpush.msra.mxu0 %v46
  %132 = vmatpush.msra.mxu0 %v42
  %133 = vmatmul.f32.gmra.mxu0 %v70
  %v134 = vpop.f32.mrf.mxu0
  %v135 = vadd.f32 %v60, %v134
  %136 = vmatmul.f32.gmra.mxu0 %v73
  %v137 = vpop.f32.mrf.mxu0
  %v138 = vadd.f32 %v60, %v137
  %139 = vmatmul.f32.gmra.mxu0 %v76
  %v140 = vpop.f32.mrf.mxu0
  %v141 = vadd.f32 %v60, %v140
  %142 = vmatmul.f32.gmra.mxu0 %v79
  %v143 = vpop.f32.mrf.mxu0
  %v144 = vadd.f32 %v60, %v143
  %145 = vmatmul.f32.gmra.mxu0 %v82
  %v146 = vpop.f32.mrf.mxu0
  %v147 = vadd.f32 %v60, %v146
  %148 = vmatmul.f32.gmra.mxu0 %v85
  %v149 = vpop.f32.mrf.mxu0
  %v150 = vadd.f32 %v60, %v149
  %151 = vmatmul.f32.gmra.mxu0 %v88
  %v152 = vpop.f32.mrf.mxu0
  %v153 = vadd.f32 %v60, %v152
  %154 = vmatmul.f32.gmra.mxu0 %v91
  %v155 = vpop.f32.mrf.mxu0
  %v156 = vadd.f32 %v60, %v155
  %157 = vmatmul.f32.gmra.mxu0 %v94
  %v158 = vpop.f32.mrf.mxu0
  %v159 = vadd.f32 %v60, %v158
  %160 = vmatmul.f32.gmra.mxu0 %v97
  %v161 = vpop.f32.mrf.mxu0
  %v162 = vadd.f32 %v60, %v161
  %163 = vmatmul.f32.gmra.mxu0 %v100
  %v164 = vpop.f32.mrf.mxu0
  %v165 = vadd.f32 %v60, %v164
  %166 = vmatmul.f32.gmra.mxu0 %v103
  %v167 = vpop.f32.mrf.mxu0
  %v168 = vadd.f32 %v60, %v167
  %169 = vmatmul.f32.gmra.mxu0 %v106
  %v170 = vpop.f32.mrf.mxu0
  %v171 = vadd.f32 %v60, %v170
  %172 = vmatmul.f32.gmra.mxu0 %v109
  %v173 = vpop.f32.mrf.mxu0
  %v174 = vadd.f32 %v60, %v173
  %175 = vmatmul.f32.gmra.mxu0 %v112
  %v176 = vpop.f32.mrf.mxu0
  %v177 = vadd.f32 %v60, %v176
  %178 = vmatmul.f32.gmra.mxu0 %v115
  %v179 = vpop.f32.mrf.mxu0
  %v180 = vadd.f32 %v60, %v179
  %181 = vdwg.mxu0
  %182 = vmatpush.msra.mxu0 0.0
  %183 = vmatpush.msra.mxu0 0.0
  %184 = vmatpush.msra.mxu0 0.0
  %185 = vmatpush.msra.mxu0 0.0
  %186 = vmatpush.msra.mxu0 0.0
  %187 = vmatpush.msra.mxu0 0.0
  %188 = vmatpush.msra.mxu0 0.0
  %189 = vmatpush.msra.mxu0 0.0
  %190 = vmatpush.msra.mxu0 0.0
  %191 = vmatpush.msra.mxu0 0.0
  %192 = vmatpush.msra.mxu0 0.0
  %193 = vmatpush.msra.mxu0 0.0
  %194 = vmatpush.msra.mxu0 %v55
  %195 = vmatpush.msra.mxu0 %v51
  %196 = vmatpush.msra.mxu0 %v47
  %197 = vmatpush.msra.mxu0 %v43
  %198 = vmatmul.f32.gmra.mxu0 %v70
  %v199 = vpop.f32.mrf.mxu0
  %v200 = vadd.f32 %v61, %v199
  %201 = vmatmul.f32.gmra.mxu0 %v73
  %v202 = vpop.f32.mrf.mxu0
  %v203 = vadd.f32 %v61, %v202
  %204 = vmatmul.f32.gmra.mxu0 %v76
  %v205 = vpop.f32.mrf.mxu0
  %v206 = vadd.f32 %v61, %v205
  %207 = vmatmul.f32.gmra.mxu0 %v79
  %v208 = vpop.f32.mrf.mxu0
  %v209 = vadd.f32 %v61, %v208
  %210 = vmatmul.f32.gmra.mxu0 %v82
  %v211 = vpop.f32.mrf.mxu0
  %v212 = vadd.f32 %v61, %v211
  %213 = vmatmul.f32.gmra.mxu0 %v85
  %v214 = vpop.f32.mrf.mxu0
  %v215 = vadd.f32 %v61, %v214
  %216 = vmatmul.f32.gmra.mxu0 %v88
  %v217 = vpop.f32.mrf.mxu0
  %v218 = vadd.f32 %v61, %v217
  %219 = vmatmul.f32.gmra.mxu0 %v91
  %v220 = vpop.f32.mrf.mxu0
  %v221 = vadd.f32 %v61, %v220
  %222 = vmatmul.f32.gmra.mxu0 %v94
  %v223 = vpop.f32.mrf.mxu0
  %v224 = vadd.f32 %v61, %v223
  %225 = vmatmul.f32.gmra.mxu0 %v97
  %v226 = vpop.f32.mrf.mxu0
  %v227 = vadd.f32 %v61, %v226
  %228 = vmatmul.f32.gmra.mxu0 %v100
  %v229 = vpop.f32.mrf.mxu0
  %v230 = vadd.f32 %v61, %v229
  %231 = vmatmul.f32.gmra.mxu0 %v103
  %v232 = vpop.f32.mrf.mxu0
  %v233 = vadd.f32 %v61, %v232
  %234 = vmatmul.f32.gmra.mxu0 %v106
  %v235 = vpop.f32.mrf.mxu0
  %v236 = vadd.f32 %v61, %v235
  %237 = vmatmul.f32.gmra.mxu0 %v109
  %v238 = vpop.f32.mrf.mxu0
  %v239 = vadd.f32 %v61, %v238
  %240 = vmatmul.f32.gmra.mxu0 %v112
  %v241 = vpop.f32.mrf.mxu0
  %v242 = vadd.f32 %v61, %v241
  %243 = vmatmul.f32.gmra.mxu0 %v115
  %v244 = vpop.f32.mrf.mxu0
  %v245 = vadd.f32 %v61, %v244
  %246 = vdwg.mxu0
  %247 = vmatpush.msra.mxu0 0.0
  %248 = vmatpush.msra.mxu0 0.0
  %249 = vmatpush.msra.mxu0 0.0
  %250 = vmatpush.msra.mxu0 0.0
  %251 = vmatpush.msra.mxu0 0.0
  %252 = vmatpush.msra.mxu0 0.0
  %253 = vmatpush.msra.mxu0 0.0
  %254 = vmatpush.msra.mxu0 0.0
  %255 = vmatpush.msra.mxu0 0.0
  %256 = vmatpush.msra.mxu0 0.0
  %257 = vmatpush.msra.mxu0 0.0
  %258 = vmatpush.msra.mxu0 0.0
  %259 = vmatpush.msra.mxu0 %v56
  %260 = vmatpush.msra.mxu0 %v52
  %261 = vmatpush.msra.mxu0 %v48
  %262 = vmatpush.msra.mxu0 %v44
  %263 = vmatmul.f32.gmra.mxu0 %v70
  %v264 = vpop.f32.mrf.mxu0
  %v265 = vadd.f32 %v62, %v264
  %266 = vmatmul.f32.gmra.mxu0 %v73
  %v267 = vpop.f32.mrf.mxu0
  %v268 = vadd.f32 %v62, %v267
  %269 = vmatmul.f32.gmra.mxu0 %v76
  %v270 = vpop.f32.mrf.mxu0
  %v271 = vadd.f32 %v62, %v270
  %272 = vmatmul.f32.gmra.mxu0 %v79
  %v273 = vpop.f32.mrf.mxu0
  %v274 = vadd.f32 %v62, %v273
  %275 = vmatmul.f32.gmra.mxu0 %v82
  %v276 = vpop.f32.mrf.mxu0
  %v277 = vadd.f32 %v62, %v276
  %278 = vmatmul.f32.gmra.mxu0 %v85
  %v279 = vpop.f32.mrf.mxu0
  %v280 = vadd.f32 %v62, %v279
  %281 = vmatmul.f32.gmra.mxu0 %v88
  %v282 = vpop.f32.mrf.mxu0
  %v283 = vadd.f32 %v62, %v282
  %284 = vmatmul.f32.gmra.mxu0 %v91
  %v285 = vpop.f32.mrf.mxu0
  %v286 = vadd.f32 %v62, %v285
  %287 = vmatmul.f32.gmra.mxu0 %v94
  %v288 = vpop.f32.mrf.mxu0
  %v289 = vadd.f32 %v62, %v288
  %290 = vmatmul.f32.gmra.mxu0 %v97
  %v291 = vpop.f32.mrf.mxu0
  %v292 = vadd.f32 %v62, %v291
  %293 = vmatmul.f32.gmra.mxu0 %v100
  %v294 = vpop.f32.mrf.mxu0
  %v295 = vadd.f32 %v62, %v294
  %296 = vmatmul.f32.gmra.mxu0 %v103
  %v297 = vpop.f32.mrf.mxu0
  %v298 = vadd.f32 %v62, %v297
  %299 = vmatmul.f32.gmra.mxu0 %v106
  %v300 = vpop.f32.mrf.mxu0
  %v301 = vadd.f32 %v62, %v300
  %302 = vmatmul.f32.gmra.mxu0 %v109
  %v303 = vpop.f32.mrf.mxu0
  %v304 = vadd.f32 %v62, %v303
  %305 = vmatmul.f32.gmra.mxu0 %v112
  %v306 = vpop.f32.mrf.mxu0
  %v307 = vadd.f32 %v62, %v306
  %308 = vmatmul.f32.gmra.mxu0 %v115
  %v309 = vpop.f32.mrf.mxu0
  %v310 = vadd.f32 %v62, %v309
  %311 = vdwg.mxu0
  %312 = vmatpush.msra.mxu0 0.0
  %313 = vmatpush.msra.mxu0 0.0
  %314 = vmatpush.msra.mxu0 0.0
  %315 = vmatpush.msra.mxu0 0.0
  %316 = vmatpush.msra.mxu0 0.0
  %317 = vmatpush.msra.mxu0 0.0
  %318 = vmatpush.msra.mxu0 0.0
  %319 = vmatpush.msra.mxu0 0.0
  %320 = vmatpush.msra.mxu0 0.0
  %321 = vmatpush.msra.mxu0 0.0
  %322 = vmatpush.msra.mxu0 0.0
  %323 = vmatpush.msra.mxu0 0.0
  %324 = vmatpush.msra.mxu0 %v57
  %325 = vmatpush.msra.mxu0 %v53
  %326 = vmatpush.msra.mxu0 %v49
  %327 = vmatpush.msra.mxu0 %v45
  %328 = vmatmul.f32.gmra.mxu0 %v70
  %v329 = vpop.f32.mrf.mxu0
  %v330 = vadd.f32 %v63, %v329
  %331 = vmatmul.f32.gmra.mxu0 %v73
  %v332 = vpop.f32.mrf.mxu0
  %v333 = vadd.f32 %v63, %v332
  %334 = vmatmul.f32.gmra.mxu0 %v76
  %v335 = vpop.f32.mrf.mxu0
  %v336 = vadd.f32 %v63, %v335
  %337 = vmatmul.f32.gmra.mxu0 %v79
  %v338 = vpop.f32.mrf.mxu0
  %v339 = vadd.f32 %v63, %v338
  %340 = vmatmul.f32.gmra.mxu0 %v82
  %v341 = vpop.f32.mrf.mxu0
  %v342 = vadd.f32 %v63, %v341
  %343 = vmatmul.f32.gmra.mxu0 %v85
  %v344 = vpop.f32.mrf.mxu0
  %v345 = vadd.f32 %v63, %v344
  %346 = vmatmul.f32.gmra.mxu0 %v88
  %v347 = vpop.f32.mrf.mxu0
  %v348 = vadd.f32 %v63, %v347
  %349 = vmatmul.f32.gmra.mxu0 %v91
  %v350 = vpop.f32.mrf.mxu0
  %v351 = vadd.f32 %v63, %v350
  %352 = vmatmul.f32.gmra.mxu0 %v94
  %v353 = vpop.f32.mrf.mxu0
  %v354 = vadd.f32 %v63, %v353
  %355 = vmatmul.f32.gmra.mxu0 %v97
  %v356 = vpop.f32.mrf.mxu0
  %v357 = vadd.f32 %v63, %v356
  %358 = vmatmul.f32.gmra.mxu0 %v100
  %v359 = vpop.f32.mrf.mxu0
  %v360 = vadd.f32 %v63, %v359
  %361 = vmatmul.f32.gmra.mxu0 %v103
  %v362 = vpop.f32.mrf.mxu0
  %v363 = vadd.f32 %v63, %v362
  %364 = vmatmul.f32.gmra.mxu0 %v106
  %v365 = vpop.f32.mrf.mxu0
  %v366 = vadd.f32 %v63, %v365
  %367 = vmatmul.f32.gmra.mxu0 %v109
  %v368 = vpop.f32.mrf.mxu0
  %v369 = vadd.f32 %v63, %v368
  %370 = vmatmul.f32.gmra.mxu0 %v112
  %v371 = vpop.f32.mrf.mxu0
  %v372 = vadd.f32 %v63, %v371
  %373 = vmatmul.f32.gmra.mxu0 %v115
  %v374 = vpop.f32.mrf.mxu0
  %v375 = vadd.f32 %v63, %v374
  %376 = vdwg.mxu0
  %v377 = vmax.f32 %v135, 0.0
  %v378 = vmax.f32 %v200, 0.0
  %v379 = vmax.f32 %v265, 0.0
  %v380 = vmax.f32 %v330, 0.0
  %v381 = vmax.f32 %v138, 0.0
  %v382 = vmax.f32 %v203, 0.0
  %v383 = vmax.f32 %v268, 0.0
  %v384 = vmax.f32 %v333, 0.0
  %v385 = vmax.f32 %v141, 0.0
  %v386 = vmax.f32 %v206, 0.0
  %v387 = vmax.f32 %v271, 0.0
  %v388 = vmax.f32 %v336, 0.0
  %v389 = vmax.f32 %v144, 0.0
  %v390 = vmax.f32 %v209, 0.0
  %v391 = vmax.f32 %v274, 0.0
  %v392 = vmax.f32 %v339, 0.0
  %v393 = vmax.f32 %v147, 0.0
  %v394 = vmax.f32 %v212, 0.0
  %v395 = vmax.f32 %v277, 0.0
  %v396 = vmax.f32 %v342, 0.0
  %v397 = vmax.f32 %v150, 0.0
  %v398 = vmax.f32 %v215, 0.0
  %v399 = vmax.f32 %v280, 0.0
  %v400 = vmax.f32 %v345, 0.0
  %v401 = vmax.f32 %v153, 0.0
  %v402 = vmax.f32 %v218, 0.0
  %v403 = vmax.f32 %v283, 0.0
  %v404 = vmax.f32 %v348, 0.0
  %v405 = vmax.f32 %v156, 0.0
  %v406 = vmax.f32 %v221, 0.0
  %v407 = vmax.f32 %v286, 0.0
  %v408 = vmax.f32 %v351, 0.0
  %v409 = vmax.f32 %v159, 0.0
  %v410 = vmax.f32 %v224, 0.0
  %v411 = vmax.f32 %v289, 0.0
  %v412 = vmax.f32 %v354, 0.0
  %v413 = vmax.f32 %v162, 0.0
  %v414 = vmax.f32 %v227, 0.0
  %v415 = vmax.f32 %v292, 0.0
  %v416 = vmax.f32 %v357, 0.0
  %v417 = vmax.f32 %v165, 0.0
  %v418 = vmax.f32 %v230, 0.0
  %v419 = vmax.f32 %v295, 0.0
  %v420 = vmax.f32 %v360, 0.0
  %v421 = vmax.f32 %v168, 0.0
  %v422 = vmax.f32 %v233, 0.0
  %v423 = vmax.f32 %v298, 0.0
  %v424 = vmax.f32 %v363, 0.0
  %v425 = vmax.f32 %v171, 0.0
  %v426 = vmax.f32 %v236, 0.0
  %v427 = vmax.f32 %v301, 0.0
  %v428 = vmax.f32 %v366, 0.0
  %v429 = vmax.f32 %v174, 0.0
  %v430 = vmax.f32 %v239, 0.0
  %v431 = vmax.f32 %v304, 0.0
  %v432 = vmax.f32 %v369, 0.0
  %v433 = vmax.f32 %v177, 0.0
  %v434 = vmax.f32 %v242, 0.0
  %v435 = vmax.f32 %v307, 0.0
  %v436 = vmax.f32 %v372, 0.0
  %v437 = vmax.f32 %v180, 0.0
  %v438 = vmax.f32 %v245, 0.0
  %v439 = vmax.f32 %v310, 0.0
  %v440 = vmax.f32 %v375, 0.0
  %v441 = vld [vmem:[%s4] sm:$0xf]
  %v443 = vperm.slane %v441, 0
  %v444 = vperm.slane %v441, 1
  %v445 = vperm.slane %v441, 2
  %v446 = vperm.slane %v441, 3
  %v451 = vmul.f32 %v377, %v443
  %v452 = vmul.f32 %v378, %v444
  %v453 = vmul.f32 %v379, %v445
  %v454 = vmul.f32 %v380, %v446
  %v455 = vmul.f32 %v381, %v443
  %v456 = vmul.f32 %v382, %v444
  %v457 = vmul.f32 %v383, %v445
  %v458 = vmul.f32 %v384, %v446
  %v459 = vmul.f32 %v385, %v443
  %v460 = vmul.f32 %v386, %v444
  %v461 = vmul.f32 %v387, %v445
  %v462 = vmul.f32 %v388, %v446
  %v463 = vmul.f32 %v389, %v443
  %v464 = vmul.f32 %v390, %v444
  %v465 = vmul.f32 %v391, %v445
  %v466 = vmul.f32 %v392, %v446
  %v467 = vmul.f32 %v393, %v443
  %v468 = vmul.f32 %v394, %v444
  %v469 = vmul.f32 %v395, %v445
  %v470 = vmul.f32 %v396, %v446
  %v471 = vmul.f32 %v397, %v443
  %v472 = vmul.f32 %v398, %v444
  %v473 = vmul.f32 %v399, %v445
  %v474 = vmul.f32 %v400, %v446
  %v475 = vmul.f32 %v401, %v443
  %v476 = vmul.f32 %v402, %v444
  %v477 = vmul.f32 %v403, %v445
  %v478 = vmul.f32 %v404, %v446
  %v479 = vmul.f32 %v405, %v443
  %v480 = vmul.f32 %v406, %v444
  %v481 = vmul.f32 %v407, %v445
  %v482 = vmul.f32 %v408, %v446
  %v483 = vmul.f32 %v409, %v443
  %v484 = vmul.f32 %v410, %v444
  %v485 = vmul.f32 %v411, %v445
  %v486 = vmul.f32 %v412, %v446
  %v487 = vmul.f32 %v413, %v443
  %v488 = vmul.f32 %v414, %v444
  %v489 = vmul.f32 %v415, %v445
  %v490 = vmul.f32 %v416, %v446
  %v491 = vmul.f32 %v417, %v443
  %v492 = vmul.f32 %v418, %v444
  %v493 = vmul.f32 %v419, %v445
  %v494 = vmul.f32 %v420, %v446
  %v495 = vmul.f32 %v421, %v443
  %v496 = vmul.f32 %v422, %v444
  %v497 = vmul.f32 %v423, %v445
  %v498 = vmul.f32 %v424, %v446
  %v499 = vmul.f32 %v425, %v443
  %v500 = vmul.f32 %v426, %v444
  %v501 = vmul.f32 %v427, %v445
  %v502 = vmul.f32 %v428, %v446
  %v503 = vmul.f32 %v429, %v443
  %v504 = vmul.f32 %v430, %v444
  %v505 = vmul.f32 %v431, %v445
  %v506 = vmul.f32 %v432, %v446
  %v507 = vmul.f32 %v433, %v443
  %v508 = vmul.f32 %v434, %v444
  %v509 = vmul.f32 %v435, %v445
  %v510 = vmul.f32 %v436, %v446
  %v511 = vmul.f32 %v437, %v443
  %v512 = vmul.f32 %v438, %v444
  %v513 = vmul.f32 %v439, %v445
  %v514 = vmul.f32 %v440, %v446
  %v515 = vadd.f32 %v451, %v452
  %v516 = vadd.f32 %v515, %v453
  %v517 = vadd.f32 %v516, %v454
  %518 = vadd.xlane.f32.xlu0 %v517
  %v519 = vpop.xlane.xlu0 %518
  %v520 = vadd.f32 %v455, %v456
  %v521 = vadd.f32 %v520, %v457
  %v522 = vadd.f32 %v521, %v458
  %523 = vadd.xlane.f32.xlu0 %v522
  %v524 = vpop.xlane.xlu0 %523
  %v525 = vadd.f32 %v459, %v460
  %v526 = vadd.f32 %v525, %v461
  %v527 = vadd.f32 %v526, %v462
  %528 = vadd.xlane.f32.xlu0 %v527
  %v529 = vpop.xlane.xlu0 %528
  %v530 = vadd.f32 %v463, %v464
  %v531 = vadd.f32 %v530, %v465
  %v532 = vadd.f32 %v531, %v466
  %533 = vadd.xlane.f32.xlu0 %v532
  %v534 = vpop.xlane.xlu0 %533
  %v535 = vadd.f32 %v467, %v468
  %v536 = vadd.f32 %v535, %v469
  %v537 = vadd.f32 %v536, %v470
  %538 = vadd.xlane.f32.xlu0 %v537
  %v539 = vpop.xlane.xlu0 %538
  %v540 = vadd.f32 %v471, %v472
  %v541 = vadd.f32 %v540, %v473
  %v542 = vadd.f32 %v541, %v474
  %543 = vadd.xlane.f32.xlu0 %v542
  %v544 = vpop.xlane.xlu0 %543
  %v545 = vadd.f32 %v475, %v476
  %v546 = vadd.f32 %v545, %v477
  %v547 = vadd.f32 %v546, %v478
  %548 = vadd.xlane.f32.xlu0 %v547
  %v549 = vpop.xlane.xlu0 %548
  %v550 = vadd.f32 %v479, %v480
  %v551 = vadd.f32 %v550, %v481
  %v552 = vadd.f32 %v551, %v482
  %553 = vadd.xlane.f32.xlu0 %v552
  %v554 = vpop.xlane.xlu0 %553
  %v555 = vadd.f32 %v483, %v484
  %v556 = vadd.f32 %v555, %v485
  %v557 = vadd.f32 %v556, %v486
  %558 = vadd.xlane.f32.xlu0 %v557
  %v559 = vpop.xlane.xlu0 %558
  %v560 = vadd.f32 %v487, %v488
  %v561 = vadd.f32 %v560, %v489
  %v562 = vadd.f32 %v561, %v490
  %563 = vadd.xlane.f32.xlu0 %v562
  %v564 = vpop.xlane.xlu0 %563
  %v565 = vadd.f32 %v491, %v492
  %v566 = vadd.f32 %v565, %v493
  %v567 = vadd.f32 %v566, %v494
  %568 = vadd.xlane.f32.xlu0 %v567
  %v569 = vpop.xlane.xlu0 %568
  %v570 = vadd.f32 %v495, %v496
  %v571 = vadd.f32 %v570, %v497
  %v572 = vadd.f32 %v571, %v498
  %573 = vadd.xlane.f32.xlu0 %v572
  %v574 = vpop.xlane.xlu0 %573
  %v575 = vadd.f32 %v499, %v500
  %v576 = vadd.f32 %v575, %v501
  %v577 = vadd.f32 %v576, %v502
  %578 = vadd.xlane.f32.xlu0 %v577
  %v579 = vpop.xlane.xlu0 %578
  %v580 = vadd.f32 %v503, %v504
  %v581 = vadd.f32 %v580, %v505
  %v582 = vadd.f32 %v581, %v506
  %583 = vadd.xlane.f32.xlu0 %v582
  %v584 = vpop.xlane.xlu0 %583
  %v585 = vadd.f32 %v507, %v508
  %v586 = vadd.f32 %v585, %v509
  %v587 = vadd.f32 %v586, %v510
  %588 = vadd.xlane.f32.xlu0 %v587
  %v589 = vpop.xlane.xlu0 %588
  %v590 = vadd.f32 %v511, %v512
  %v591 = vadd.f32 %v590, %v513
  %v592 = vadd.f32 %v591, %v514
  %593 = vadd.xlane.f32.xlu0 %v592
  %v594 = vpop.xlane.xlu0 %593
  %s595 = sld [smem:[#allocation2]]
  %v596 = vstv %s595
  %v597 = vadd.f32 %v519, %v596
  %v598 = vadd.f32 %v524, %v596
  %v599 = vadd.f32 %v529, %v596
  %v600 = vadd.f32 %v534, %v596
  %v601 = vadd.f32 %v539, %v596
  %v602 = vadd.f32 %v544, %v596
  %v603 = vadd.f32 %v549, %v596
  %v604 = vadd.f32 %v554, %v596
  %v605 = vadd.f32 %v559, %v596
  %v606 = vadd.f32 %v564, %v596
  %v607 = vadd.f32 %v569, %v596
  %v608 = vadd.f32 %v574, %v596
  %v609 = vadd.f32 %v579, %v596
  %v610 = vadd.f32 %v584, %v596
  %v611 = vadd.f32 %v589, %v596
  %v612 = vadd.f32 %v594, %v596
  %v629 = vlaneseq
  %v630 = vand.u32 %v629, 127
  %v631 = vperm.slane %v597, %v630
  %v632 = vadd.s32 %v630, 4294967288
  %v633 = vperm.slane %v598, %v632
  %vm634 = vcmask 130112
  %v635 = vsel %vm634, %v633, %v631
  %v636 = vadd.s32 %v630, 4294967280
  %v637 = vperm.slane %v599, %v636
  %vm638 = vcmask 195712
  %v639 = vsel %vm638, %v637, %v635
  %v640 = vadd.s32 %v630, 4294967272
  %v641 = vperm.slane %v600, %v640
  %vm642 = vcmask 261312
  %v643 = vsel %vm642, %v641, %v639
  %v644 = vadd.s32 %v630, 4294967264
  %v645 = vperm.slane %v601, %v644
  %vm646 = vcmask 326912
  %v647 = vsel %vm646, %v645, %v643
  %v648 = vadd.s32 %v630, 4294967256
  %v649 = vperm.slane %v602, %v648
  %vm650 = vcmask 392512
  %v651 = vsel %vm650, %v649, %v647
  %v652 = vadd.s32 %v630, 4294967248
  %v653 = vperm.slane %v603, %v652
  %vm654 = vcmask 458112
  %v655 = vsel %vm654, %v653, %v651
  %v656 = vadd.s32 %v630, 4294967240
  %v657 = vperm.slane %v604, %v656
  %vm658 = vcmask 523712
  %v659 = vsel %vm658, %v657, %v655
  %v660 = vadd.s32 %v630, 4294967232
  %v661 = vperm.slane %v605, %v660
  %vm662 = vcmask 589312
  %v663 = vsel %vm662, %v661, %v659
  %v664 = vadd.s32 %v630, 4294967224
  %v665 = vperm.slane %v606, %v664
  %vm666 = vcmask 654912
  %v667 = vsel %vm666, %v665, %v663
  %v668 = vadd.s32 %v630, 4294967216
  %v669 = vperm.slane %v607, %v668
  %vm670 = vcmask 720512
  %v671 = vsel %vm670, %v669, %v667
  %v672 = vadd.s32 %v630, 4294967208
  %v673 = vperm.slane %v608, %v672
  %vm674 = vcmask 786112
  %v675 = vsel %vm674, %v673, %v671
  %v676 = vadd.s32 %v630, 4294967200
  %v677 = vperm.slane %v609, %v676
  %vm678 = vcmask 851712
  %v679 = vsel %vm678, %v677, %v675
  %v680 = vadd.s32 %v630, 4294967192
  %v681 = vperm.slane %v610, %v680
  %vm682 = vcmask 917312
  %v683 = vsel %vm682, %v681, %v679
  %v684 = vadd.s32 %v630, 4294967184
  %v685 = vperm.slane %v611, %v684
  %vm686 = vcmask 982912
  %v687 = vsel %vm686, %v685, %v683
  %v688 = vadd.s32 %v630, 4294967176
  %v689 = vperm.slane %v612, %v688
  %vm690 = vcmask 1048512
  %v691 = vsel %vm690, %v689, %v687
  %693 = vst [vmem:[%s6] sm:$0x1] %v691
  %v694 = vld [vmem:[%s1] sm:$0x1]
  %v696 = vperm.slane %v694, 0
  %v697 = vlaneseq
  %v698 = vshrl.u32 %v697, 7
  %700 = vset.pattern.permute.xlu0 %v698
  %701 = vperm.xlu0 %700, %v696
  %v702 = vpop.permute.xlu0 %701
  %v703 = vlaneseq
  %v704 = vshrl.u32 %v703, 7
  %v705 = vadd.s32 %v704, 8
  %706 = vset.pattern.permute.xlu0 %v705
  %707 = vperm.xlu0 %706, %v696
  %v708 = vpop.permute.xlu0 %707
  %v709 = vlaneseq
  %v710 = vshrl.u32 %v709, 7
  %v711 = vadd.s32 %v710, 16
  %712 = vset.pattern.permute.xlu0 %v711
  %713 = vperm.xlu0 %712, %v696
  %v714 = vpop.permute.xlu0 %713
  %v715 = vlaneseq
  %v716 = vshrl.u32 %v715, 7
  %v717 = vadd.s32 %v716, 24
  %718 = vset.pattern.permute.xlu0 %v717
  %719 = vperm.xlu0 %718, %v696
  %v720 = vpop.permute.xlu0 %719
  %v721 = vlaneseq
  %v722 = vshrl.u32 %v721, 7
  %v723 = vadd.s32 %v722, 32
  %724 = vset.pattern.permute.xlu0 %v723
  %725 = vperm.xlu0 %724, %v696
  %v726 = vpop.permute.xlu0 %725
  %v727 = vlaneseq
  %v728 = vshrl.u32 %v727, 7
  %v729 = vadd.s32 %v728, 40
  %730 = vset.pattern.permute.xlu0 %v729
  %731 = vperm.xlu0 %730, %v696
  %v732 = vpop.permute.xlu0 %731
  %v733 = vlaneseq
  %v734 = vshrl.u32 %v733, 7
  %v735 = vadd.s32 %v734, 48
  %736 = vset.pattern.permute.xlu0 %v735
  %737 = vperm.xlu0 %736, %v696
  %v738 = vpop.permute.xlu0 %737
  %v739 = vlaneseq
  %v740 = vshrl.u32 %v739, 7
  %v741 = vadd.s32 %v740, 56
  %742 = vset.pattern.permute.xlu0 %v741
  %743 = vperm.xlu0 %742, %v696
  %v744 = vpop.permute.xlu0 %743
  %v745 = vlaneseq
  %v746 = vshrl.u32 %v745, 7
  %v747 = vadd.s32 %v746, 64
  %748 = vset.pattern.permute.xlu0 %v747
  %749 = vperm.xlu0 %748, %v696
  %v750 = vpop.permute.xlu0 %749
  %v751 = vlaneseq
  %v752 = vshrl.u32 %v751, 7
  %v753 = vadd.s32 %v752, 72
  %754 = vset.pattern.permute.xlu0 %v753
  %755 = vperm.xlu0 %754, %v696
  %v756 = vpop.permute.xlu0 %755
  %v757 = vlaneseq
  %v758 = vshrl.u32 %v757, 7
  %v759 = vadd.s32 %v758, 80
  %760 = vset.pattern.permute.xlu0 %v759
  %761 = vperm.xlu0 %760, %v696
  %v762 = vpop.permute.xlu0 %761
  %v763 = vlaneseq
  %v764 = vshrl.u32 %v763, 7
  %v765 = vadd.s32 %v764, 88
  %766 = vset.pattern.permute.xlu0 %v765
  %767 = vperm.xlu0 %766, %v696
  %v768 = vpop.permute.xlu0 %767
  %v769 = vlaneseq
  %v770 = vshrl.u32 %v769, 7
  %v771 = vadd.s32 %v770, 96
  %772 = vset.pattern.permute.xlu0 %v771
  %773 = vperm.xlu0 %772, %v696
  %v774 = vpop.permute.xlu0 %773
  %v775 = vlaneseq
  %v776 = vshrl.u32 %v775, 7
  %v777 = vadd.s32 %v776, 104
  %778 = vset.pattern.permute.xlu0 %v777
  %779 = vperm.xlu0 %778, %v696
  %v780 = vpop.permute.xlu0 %779
  %v781 = vlaneseq
  %v782 = vshrl.u32 %v781, 7
  %v783 = vadd.s32 %v782, 112
  %784 = vset.pattern.permute.xlu0 %v783
  %785 = vperm.xlu0 %784, %v696
  %v786 = vpop.permute.xlu0 %785
  %v787 = vlaneseq
  %v788 = vshrl.u32 %v787, 7
  %v789 = vadd.s32 %v788, 120
  %790 = vset.pattern.permute.xlu0 %v789
  %791 = vperm.xlu0 %790, %v696
  %v792 = vpop.permute.xlu0 %791
  %v809 = vsub.f32 %v597, %v702
  %v810 = vsub.f32 %v598, %v708
  %v811 = vsub.f32 %v599, %v714
  %v812 = vsub.f32 %v600, %v720
  %v813 = vsub.f32 %v601, %v726
  %v814 = vsub.f32 %v602, %v732
  %v815 = vsub.f32 %v603, %v738
  %v816 = vsub.f32 %v604, %v744
  %v817 = vsub.f32 %v605, %v750
  %v818 = vsub.f32 %v606, %v756
  %v819 = vsub.f32 %v607, %v762
  %v820 = vsub.f32 %v608, %v768
  %v821 = vsub.f32 %v609, %v774
  %v822 = vsub.f32 %v610, %v780
  %v823 = vsub.f32 %v611, %v786
  %v824 = vsub.f32 %v612, %v792
  %v825 = vmul.f32 %v809, %v809
  %v826 = vmul.f32 %v810, %v810
  %v827 = vmul.f32 %v811, %v811
  %v828 = vmul.f32 %v812, %v812
  %v829 = vmul.f32 %v813, %v813
  %v830 = vmul.f32 %v814, %v814
  %v831 = vmul.f32 %v815, %v815
  %v832 = vmul.f32 %v816, %v816
  %v833 = vmul.f32 %v817, %v817
  %v834 = vmul.f32 %v818, %v818
  %v835 = vmul.f32 %v819, %v819
  %v836 = vmul.f32 %v820, %v820
  %v837 = vmul.f32 %v821, %v821
  %v838 = vmul.f32 %v822, %v822
  %v839 = vmul.f32 %v823, %v823
  %v840 = vmul.f32 %v824, %v824
  %857 = vset.pattern.permute.xlu0 0
  %858 = vperm.xlu0 %857, %v825
  %v859 = vpop.permute.xlu0 %858
  %860 = vset.pattern.permute.xlu0 0
  %861 = vperm.xlu0 %860, %v826
  %v862 = vpop.permute.xlu0 %861
  %863 = vset.pattern.permute.xlu0 0
  %864 = vperm.xlu0 %863, %v827
  %v865 = vpop.permute.xlu0 %864
  %866 = vset.pattern.permute.xlu0 0
  %867 = vperm.xlu0 %866, %v828
  %v868 = vpop.permute.xlu0 %867
  %869 = vset.pattern.permute.xlu0 0
  %870 = vperm.xlu0 %869, %v829
  %v871 = vpop.permute.xlu0 %870
  %872 = vset.pattern.permute.xlu0 0
  %873 = vperm.xlu0 %872, %v830
  %v874 = vpop.permute.xlu0 %873
  %875 = vset.pattern.permute.xlu0 0
  %876 = vperm.xlu0 %875, %v831
  %v877 = vpop.permute.xlu0 %876
  %878 = vset.pattern.permute.xlu0 0
  %879 = vperm.xlu0 %878, %v832
  %v880 = vpop.permute.xlu0 %879
  %881 = vset.pattern.permute.xlu0 0
  %882 = vperm.xlu0 %881, %v833
  %v883 = vpop.permute.xlu0 %882
  %884 = vset.pattern.permute.xlu0 0
  %885 = vperm.xlu0 %884, %v834
  %v886 = vpop.permute.xlu0 %885
  %887 = vset.pattern.permute.xlu0 0
  %888 = vperm.xlu0 %887, %v835
  %v889 = vpop.permute.xlu0 %888
  %890 = vset.pattern.permute.xlu0 0
  %891 = vperm.xlu0 %890, %v836
  %v892 = vpop.permute.xlu0 %891
  %893 = vset.pattern.permute.xlu0 0
  %894 = vperm.xlu0 %893, %v837
  %v895 = vpop.permute.xlu0 %894
  %896 = vset.pattern.permute.xlu0 0
  %897 = vperm.xlu0 %896, %v838
  %v898 = vpop.permute.xlu0 %897
  %899 = vset.pattern.permute.xlu0 0
  %900 = vperm.xlu0 %899, %v839
  %v901 = vpop.permute.xlu0 %900
  %902 = vset.pattern.permute.xlu0 0
  %903 = vperm.xlu0 %902, %v840
  %v904 = vpop.permute.xlu0 %903
  %v905 = vperm.slane %v859, %v630
  %v906 = vperm.slane %v862, %v632
  %v907 = vsel %vm634, %v906, %v905
  %v908 = vperm.slane %v865, %v636
  %v909 = vsel %vm638, %v908, %v907
  %v910 = vperm.slane %v868, %v640
  %v911 = vsel %vm642, %v910, %v909
  %v912 = vperm.slane %v871, %v644
  %v913 = vsel %vm646, %v912, %v911
  %v914 = vperm.slane %v874, %v648
  %v915 = vsel %vm650, %v914, %v913
  %v916 = vperm.slane %v877, %v652
  %v917 = vsel %vm654, %v916, %v915
  %v918 = vperm.slane %v880, %v656
  %v919 = vsel %vm658, %v918, %v917
  %v920 = vperm.slane %v883, %v660
  %v921 = vsel %vm662, %v920, %v919
  %v922 = vperm.slane %v886, %v664
  %v923 = vsel %vm666, %v922, %v921
  %v924 = vperm.slane %v889, %v668
  %v925 = vsel %vm670, %v924, %v923
  %v926 = vperm.slane %v892, %v672
  %v927 = vsel %vm674, %v926, %v925
  %v928 = vperm.slane %v895, %v676
  %v929 = vsel %vm678, %v928, %v927
  %v930 = vperm.slane %v898, %v680
  %v931 = vsel %vm682, %v930, %v929
  %v932 = vperm.slane %v901, %v684
  %v933 = vsel %vm686, %v932, %v931
  %v934 = vperm.slane %v904, %v688
  %v935 = vsel %vm690, %v934, %v933
  %937 = vst [vmem:[%s7] sm:$0x1] %v935
  // Predicated region
  $region26: #{value_prediction_head.1} parent=0 // pred_check
    _
  $region27: #{value_prediction_head.1} parent=0 // pred_check_branch
    %939 = sbr.rel (0) target = $region29
  $region28: #{value_prediction_head.1} parent=0 // pred_region
    _
  $region29: #{value_prediction_head.1} parent=0 // pred_fallthru
    _
  // Predicated region
  $region30: #{value_prediction_head.1} parent=0 // pred_check
    _
  $region31: #{value_prediction_head.1} parent=0 // pred_check_branch
    %941 = sbr.rel (0) target = $region33
  $region32: #{value_prediction_head.1} parent=0 // pred_region
    _
  $region33: #{value_prediction_head.1} parent=0 // pred_fallthru
    _
  // Predicated region
  $region34: #{value_prediction_head.1} parent=0 // pred_check
    _
  $region35: #{value_prediction_head.1} parent=0 // pred_check_branch
    %943 = sbr.rel (0) target = $region37
  $region36: #{value_prediction_head.1} parent=0 // pred_region
    _
  $region37: #{value_prediction_head.1} parent=0 // pred_fallthru
    _
  // Predicated region
  $region38: #{value_prediction_head.1} parent=0 // pred_check
    _
  $region39: #{value_prediction_head.1} parent=0 // pred_check_branch
    %945 = sbr.rel (0) target = $region41
  $region40: #{value_prediction_head.1} parent=0 // pred_region
    _
  $region41: #{value_prediction_head.1} parent=0 // pred_fallthru
    _

</llo_original>
